<compile_context>
chip_gen: v7x
topology: tpu7x:2x2x1
jax: 0.10.0
libtpu: 0.0.40
codegen_flags: <defaults>
</compile_context>

<pallas_src>
import jax
import jax.numpy as jnp
from jax.experimental import pallas as pl
from jax.experimental.pallas import tpu as pltpu  # noqa: F401  (vmem_limit/bf16 hooks at larger sizes)


# ----------------------------------------------------------------------------
# In-kernel compute helpers (operate on values, not refs)
# ----------------------------------------------------------------------------
def _gcn_layer(a, x, w, b):
    """ReLU(A_norm @ X @ W + b), with the cheaper matmul association."""
    if w.shape[1] <= x.shape[1]:
        # narrowing layer: contract A against the smaller output width
        h = jnp.dot(a, jnp.dot(x, w, preferred_element_type=jnp.float32),
                    preferred_element_type=jnp.float32)
    else:
        # widening layer: contract A against the smaller input width
        h = jnp.dot(jnp.dot(a, x, preferred_element_type=jnp.float32), w,
                    preferred_element_type=jnp.float32)
    return jnp.maximum(h + b, 0.0)


# ----------------------------------------------------------------------------
# Fused kernel (whole forward in one pallas_call, everything VMEM-resident)
# ----------------------------------------------------------------------------
def _make_fused_kernel(n_layers_p, n_layers_s, num_classes, w_dims, v_widths):
    """w_dims[k] = (din, dout) of matrix slot k; v_widths[k] = width of vec row k.

    Slot layout (matrices / vector rows share indices 0..Lp+Ls+2):
      0                     : feature-encoder linear (Fin -> Hx)
      1 .. Lp               : p_encoder conv layers
      Lp+1                  : p_encoder head (H4 -> C)
      Lp+2 .. Lp+Ls+1       : s_encoder conv layers
      Lp+Ls+2               : s_encoder head (H4 -> C)
    Extra vector rows:
      Lp+Ls+3               : concat(bn0_gamma, bn1_gamma)   (2C)
      Lp+Ls+4               : concat(bn0_beta,  bn1_beta)    (2C)
    """
    Lp, Ls, C = n_layers_p, n_layers_s, num_classes

    def kernel(a_p_ref, x_p_ref, a_s_ref, x_s_ref, idx_ref, nw_ref,
               vec_ref, w_ref, out_ref):
        def W(k):                                   # (din, dout) weight slice
            din, dout = w_dims[k]
            return w_ref[k][:din, :dout]

        def V(k):                                   # (1, width) bias/affine row
            return vec_ref[k:k + 1][:, :v_widths[k]]

        a_p = a_p_ref[...]                          # (Np, Np)
        a_s = a_s_ref[...]                          # (Ns, Ns)
        idx = idx_ref[...]                          # (B, 1) int32
        node_w = nw_ref[...]                        # (Np, 2) = [p_weight | s_weight]

        # ---- p branch: GCN conv stack on all Np nodes (pre-head) -------------
        h = x_p_ref[...]                            # (Np, Fin)
        for l in range(Lp):
            h = _gcn_layer(a_p, h, W(1 + l), V(1 + l))
        h_last = h.shape[1]

        # ---- ONE one-hot gather matmul over [h_p | p_w | s_w] (MXU) ----------
        B = idx.shape[0]
        Np = h.shape[0]
        cols = jax.lax.broadcasted_iota(jnp.int32, (B, Np), 1)
        onehot = (cols == idx).astype(jnp.float32)                        # (B, Np)
        gath = jnp.dot(onehot, jnp.concatenate([h, node_w], axis=1),
                       preferred_element_type=jnp.float32)                # (B, H4+2)
        hp = gath[:, :h_last]                                             # (B, H4)
        pw = gath[:, h_last:h_last + 1]                                   # (B, 1)
        sw = gath[:, h_last + 1:h_last + 2]                               # (B, 1)

        # p head on the B gathered rows (bias commutes through one-hot rows)
        x_p = jnp.dot(hp, W(Lp + 1),
                      preferred_element_type=jnp.float32) + V(Lp + 1)     # (B, C)

        # ---- s branch: LinearEncoder + GCN stack + head ----------------------
        hs = jnp.dot(x_s_ref[...], W(0),
                     preferred_element_type=jnp.float32) + V(0)           # (Ns, Hx)
        for l in range(Ls):
            hs = _gcn_layer(a_s, hs, W(Lp + 2 + l), V(Lp + 2 + l))
        x_s = jnp.dot(hs, W(Lp + Ls + 2),
                      preferred_element_type=jnp.float32) + V(Lp + Ls + 2)  # (B, C)

        # ---- fused BatchNorm over [x_p | x_s] (one stats pass), combine ------
        gamma = V(Lp + Ls + 3)                                            # (1, 2C)
        beta = V(Lp + Ls + 4)                                             # (1, 2C)
        xc = jnp.concatenate([x_p, x_s], axis=1)                          # (B, 2C)
        mean = jnp.mean(xc, axis=0, keepdims=True)
        var = jnp.mean((xc - mean) * (xc - mean), axis=0, keepdims=True)
        xn = (xc - mean) * jax.lax.rsqrt(var + 1e-5) * gamma + beta

        # ---- weighted combine: single store of the final result --------------
        out_ref[...] = (pw * xn[:, :C] + sw * xn[:, C:2 * C]).astype(out_ref.dtype)

    return kernel


def _full_spec(shape):
    return pl.BlockSpec(shape, lambda: tuple(0 for _ in shape))


def attr_atk_community_forward(params, batch_p, batch_s, batch_idx):
    a_p, x_p0 = batch_p["a_norm"], batch_p["x"]
    a_s, x_s0 = batch_s["a_norm"], batch_s["x"]
    B = batch_idx.shape[0]
    # The s-branch contract of the reference forward: one structure-graph node
    # per batch_idx entry (row i of x_s pairs with batch_idx[i]).
    assert x_s0.shape[0] == B, "s-branch assumes Ns == len(batch_idx)"
    C = params["bn0_gamma"].shape[-1]
    Lp = len(params["p_encoder"]["convs"])
    Ls = len(params["s_encoder"]["convs"])

    # ---- pack parameters into slabs (slot order documented in the kernel) ----
    mats = [params["feat_w"]]
    vecs = [params["feat_b"]]
    for (w, b) in params["p_encoder"]["convs"]:
        mats.append(w); vecs.append(b)
    wph, bph = params["p_encoder"]["head"]
    mats.append(wph); vecs.append(bph)
    for (w, b) in params["s_encoder"]["convs"]:
        mats.append(w); vecs.append(b)
    wsh, bsh = params["s_encoder"]["head"]
    mats.append(wsh); vecs.append(bsh)
    vecs.append(jnp.concatenate([params["bn0_gamma"], params["bn1_gamma"]]))
    vecs.append(jnp.concatenate([params["bn0_beta"], params["bn1_beta"]]))

    w_dims = tuple((int(m.shape[0]), int(m.shape[1])) for m in mats)
    v_widths = tuple(int(v.shape[-1]) for v in vecs)

    max_in = max(d[0] for d in w_dims)
    max_out = max(d[1] for d in w_dims)
    w_slab = jnp.stack([
        jnp.pad(m, ((0, max_in - m.shape[0]), (0, max_out - m.shape[1])))
        for m in mats
    ])                                                        # (n_mats, max_in, max_out)

    vec_w = max(128, max(v_widths))                           # lane-pad the vector slab
    vec_slab = jnp.stack([
        jnp.pad(v.reshape(-1), (0, vec_w - v.shape[-1])) for v in vecs
    ])                                                        # (n_vecs, 128)

    node_w = jnp.concatenate([params["p_weight"], params["s_weight"]], axis=1)  # (Np, 2)
    idx2 = batch_idx.astype(jnp.int32).reshape(B, 1)

    kernel = _make_fused_kernel(Lp, Ls, C, w_dims, v_widths)
    flat_inputs = [a_p, x_p0, a_s, x_s0, idx2, node_w, vec_slab, w_slab]
    out_shape = (B, C)
    return pl.pallas_call(
        kernel,
        out_shape=jax.ShapeDtypeStruct(out_shape, jnp.float32),
        in_specs=[_full_spec(x.shape) for x in flat_inputs],
        out_specs=_full_spec(out_shape),
    )(*flat_inputs)


# ----------------------------------------------------------------------------
# Graph preprocessing & deterministic parameter construction (plain JAX glue)
# ----------------------------------------------------------------------------
def normalize_adj(adj):
    # Symmetric normalization with self loops.
    n = adj.shape[0]
    a_hat = adj + jnp.eye(n, dtype=adj.dtype)
    deg = jnp.sum(a_hat, axis=1)
    d_inv_sqrt = jax.lax.rsqrt(jnp.maximum(deg, 1e-12))
    return a_hat * d_inv_sqrt[:, None] * d_inv_sqrt[None, :]


def glorot(key, shape):
    fan_in, fan_out = shape
    scale = jnp.sqrt(2.0 / (fan_in + fan_out))
    return scale * jax.random.normal(key, shape, dtype=jnp.float32)


def build_params(key, x_in, x_hidden, gnn_hidden, num_classes, gnn_layers,
                 num_nodes):
    keys = jax.random.split(key, 16)
    ki = iter(range(16))

    def gcn_params(in_dim, hidden_dim, n_layers):
        convs = []
        d = in_dim
        for _ in range(n_layers):
            w = glorot(keys[next(ki)], (d, hidden_dim))
            b = jnp.zeros((hidden_dim,), jnp.float32)
            convs.append((w, b))
            d = hidden_dim
        head = (glorot(keys[next(ki)], (d, num_classes)),
                jnp.zeros((num_classes,), jnp.float32))
        return {"convs": convs, "head": head}

    hid4 = gnn_hidden * 4
    params = {
        # p_encoder: in_channels['x_in'] -> gnn_hidden*4 -> num_classes
        "p_encoder": gcn_params(x_in, hid4, gnn_layers),
        # s_encoder (c_encoder in __init__): gnn_in=x_hidden -> gnn_hidden*4
        "s_encoder": gcn_params(x_hidden, hid4, gnn_layers),
        # LinearEncoder('x'): x_in -> x_hidden
        "feat_w": glorot(keys[next(ki)], (x_in, x_hidden)),
        "feat_b": jnp.zeros((x_hidden,), jnp.float32),
        # BatchNorm1d affine params (PyTorch default init)
        "bn0_gamma": jnp.ones((num_classes,), jnp.float32),
        "bn0_beta": jnp.zeros((num_classes,), jnp.float32),
        "bn1_gamma": jnp.ones((num_classes,), jnp.float32),
        "bn1_beta": jnp.zeros((num_classes,), jnp.float32),
        # node weights: ones * 0.5, shape (num_nodes, 1)
        "p_weight": jnp.ones((num_nodes, 1), jnp.float32) * 0.5,
        "s_weight": jnp.ones((num_nodes, 1), jnp.float32) * 0.5,
    }
    return params


def random_graph(key, n_nodes, feat_dim, p_edge=0.3):
    kx, ka = jax.random.split(key)
    x = jax.random.normal(kx, (n_nodes, feat_dim), dtype=jnp.float32)
    u = jax.random.uniform(ka, (n_nodes, n_nodes))
    adj = (u < p_edge).astype(jnp.float32)
    adj = jnp.maximum(adj, adj.T)                       # symmetric
    adj = adj * (1.0 - jnp.eye(n_nodes, dtype=jnp.float32))
    return {"x": x, "a_norm": normalize_adj(adj)}


# ----------------------------------------------------------------------------
if __name__ == "__main__":
    # Small config consistent with the module's __init__ signature.
    x_in = 8            # in_channels['x_in']
    x_hidden = 16       # hidden_channels['x_hidden']
    gnn_hidden = 8      # hidden_channels['gnn_hidden']  (encoders use *4 = 32)
    num_classes = 4
    gnn_layers = 2
    num_nodes_p = 16    # nodes in the p (attribute) graph
    num_nodes_s = 8     # nodes in the s (structure) graph == len(batch_idx)

    key = jax.random.PRNGKey(0)
    k_params, k_gp, k_gs, k_idx = jax.random.split(key, 4)

    params = build_params(k_params, x_in, x_hidden, gnn_hidden, num_classes,
                          gnn_layers, num_nodes_p)

    batch_p = random_graph(k_gp, num_nodes_p, x_in)
    batch_s = random_graph(k_gs, num_nodes_s, x_in)
    batch_idx = jax.random.permutation(k_idx, num_nodes_p)[:num_nodes_s]

    fwd = jax.jit(attr_atk_community_forward)
    out = fwd(params, batch_p, batch_s, batch_idx)
    jax.block_until_ready(out)

    assert out.shape == (num_nodes_s, num_classes)
    assert bool(jnp.all(jnp.isfinite(out)))
    print("KERNEL_OK")
</pallas_src>

<mosaic_0001>
module attributes {stable_mosaic.version = 11 : i64} {
  func.func @kernel(%arg0: memref<16x16xf32, #tpu.memory_space<vmem>>, %arg1: memref<16x8xf32, #tpu.memory_space<vmem>>, %arg2: memref<8x8xf32, #tpu.memory_space<vmem>>, %arg3: memref<8x8xf32, #tpu.memory_space<vmem>>, %arg4: memref<8x1xi32, #tpu.memory_space<vmem>>, %arg5: memref<16x2xf32, #tpu.memory_space<vmem>>, %arg6: memref<9x128xf32, #tpu.memory_space<vmem>>, %arg7: memref<7x32x32xf32, #tpu.memory_space<vmem>>, %arg8: memref<8x4xf32, #tpu.memory_space<vmem>>) attributes {dimension_semantics = [], scalar_prefetch = 0 : i64, scratch_operands = 0 : i64, tpu.core_type = #tpu.core_type<tc>} {
    %c0 = arith.constant 0 : index
    %c0_0 = arith.constant 0 : index
    %0 = vector.load %arg0[%c0, %c0_0] : memref<16x16xf32, #tpu.memory_space<vmem>>, vector<16x16xf32>
    %c0_1 = arith.constant 0 : index
    %c0_2 = arith.constant 0 : index
    %1 = vector.load %arg2[%c0_1, %c0_2] : memref<8x8xf32, #tpu.memory_space<vmem>>, vector<8x8xf32>
    %c0_3 = arith.constant 0 : index
    %c0_4 = arith.constant 0 : index
    %2 = vector.load %arg4[%c0_3, %c0_4] : memref<8x1xi32, #tpu.memory_space<vmem>>, vector<8x1xi32>
    %c0_5 = arith.constant 0 : index
    %c0_6 = arith.constant 0 : index
    %3 = vector.load %arg5[%c0_5, %c0_6] : memref<16x2xf32, #tpu.memory_space<vmem>>, vector<16x2xf32>
    %c0_7 = arith.constant 0 : index
    %c0_8 = arith.constant 0 : index
    %4 = vector.load %arg1[%c0_7, %c0_8] : memref<16x8xf32, #tpu.memory_space<vmem>>, vector<16x8xf32>
    %c1 = arith.constant 1 : index
    %c0_9 = arith.constant 0 : index
    %c0_10 = arith.constant 0 : index
    %5 = vector.load %arg7[%c1, %c0_9, %c0_10] : memref<7x32x32xf32, #tpu.memory_space<vmem>>, vector<1x32x32xf32>
    %6 = vector.shape_cast %5 : vector<1x32x32xf32> to vector<32x32xf32>
    %7 = vector.extract_strided_slice %6 {offsets = [0, 0], sizes = [8, 32], strides = [1, 1]} : vector<32x32xf32> to vector<8x32xf32>
    %c1_11 = arith.constant 1 : index
    %c0_12 = arith.constant 0 : index
    %8 = vector.load %arg6[%c1_11, %c0_12] : memref<9x128xf32, #tpu.memory_space<vmem>>, vector<1x128xf32>
    %9 = vector.extract_strided_slice %8 {offsets = [0, 0], sizes = [1, 32], strides = [1, 1]} : vector<1x128xf32> to vector<1x32xf32>
    %cst = arith.constant dense<0.000000e+00> : vector<16x8xf32>
    %10 = tpu.matmul %0, %4, %cst {dimension_numbers = #tpu.dot_dimension_numbers<[1], [0], [0], [1], [0, 0, 1, 1], [], []>} : vector<16x16xf32>, vector<16x8xf32>, vector<16x8xf32> -> vector<16x8xf32>
    %cst_13 = arith.constant dense<0.000000e+00> : vector<16x32xf32>
    %11 = tpu.matmul %10, %7, %cst_13 {dimension_numbers = #tpu.dot_dimension_numbers<[1], [0], [0], [1], [0, 0, 1, 1], [], []>} : vector<16x8xf32>, vector<8x32xf32>, vector<16x32xf32> -> vector<16x32xf32>
    %12 = vector.broadcast %9 : vector<1x32xf32> to vector<16x32xf32>
    %13 = arith.addf %11, %12 : vector<16x32xf32>
    %cst_14 = arith.constant 0.000000e+00 : f32
    %14 = vector.broadcast %cst_14 : f32 to vector<16x32xf32>
    %15 = arith.maximumf %13, %14 : vector<16x32xf32>
    %c2 = arith.constant 2 : index
    %c0_15 = arith.constant 0 : index
    %c0_16 = arith.constant 0 : index
    %16 = vector.load %arg7[%c2, %c0_15, %c0_16] : memref<7x32x32xf32, #tpu.memory_space<vmem>>, vector<1x32x32xf32>
    %17 = vector.shape_cast %16 : vector<1x32x32xf32> to vector<32x32xf32>
    %c2_17 = arith.constant 2 : index
    %c0_18 = arith.constant 0 : index
    %18 = vector.load %arg6[%c2_17, %c0_18] : memref<9x128xf32, #tpu.memory_space<vmem>>, vector<1x128xf32>
    %19 = vector.extract_strided_slice %18 {offsets = [0, 0], sizes = [1, 32], strides = [1, 1]} : vector<1x128xf32> to vector<1x32xf32>
    %cst_19 = arith.constant dense<0.000000e+00> : vector<16x32xf32>
    %20 = tpu.matmul %15, %17, %cst_19 {dimension_numbers = #tpu.dot_dimension_numbers<[1], [0], [0], [1], [0, 0, 1, 1], [], []>} : vector<16x32xf32>, vector<32x32xf32>, vector<16x32xf32> -> vector<16x32xf32>
    %cst_20 = arith.constant dense<0.000000e+00> : vector<16x32xf32>
    %21 = tpu.matmul %0, %20, %cst_20 {dimension_numbers = #tpu.dot_dimension_numbers<[1], [0], [0], [1], [0, 0, 1, 1], [], []>} : vector<16x16xf32>, vector<16x32xf32>, vector<16x32xf32> -> vector<16x32xf32>
    %22 = vector.broadcast %19 : vector<1x32xf32> to vector<16x32xf32>
    %23 = arith.addf %21, %22 : vector<16x32xf32>
    %cst_21 = arith.constant 0.000000e+00 : f32
    %24 = vector.broadcast %cst_21 : f32 to vector<16x32xf32>
    %25 = arith.maximumf %23, %24 : vector<16x32xf32>
    %26 = tpu.iota {dimensions = array<i32: 1>} : vector<8x16xi32>
    %27 = vector.broadcast %2 : vector<8x1xi32> to vector<8x16xi32>
    %28 = arith.cmpi eq, %26, %27 : vector<8x16xi32>
    %29 = arith.extui %28 : vector<8x16xi1> to vector<8x16xi32>
    %30 = arith.sitofp %29 : vector<8x16xi32> to vector<8x16xf32>
    %31 = tpu.concatenate %25, %3 in 1 : vector<16x32xf32>, vector<16x2xf32> -> vector<16x34xf32>
    %cst_22 = arith.constant dense<0.000000e+00> : vector<8x34xf32>
    %32 = tpu.matmul %30, %31, %cst_22 {dimension_numbers = #tpu.dot_dimension_numbers<[1], [0], [0], [1], [0, 0, 1, 1], [], []>} : vector<8x16xf32>, vector<16x34xf32>, vector<8x34xf32> -> vector<8x34xf32>
    %33 = vector.extract_strided_slice %32 {offsets = [0, 0], sizes = [8, 32], strides = [1, 1]} : vector<8x34xf32> to vector<8x32xf32>
    %34 = vector.extract_strided_slice %32 {offsets = [0, 32], sizes = [8, 1], strides = [1, 1]} : vector<8x34xf32> to vector<8x1xf32>
    %35 = vector.extract_strided_slice %32 {offsets = [0, 33], sizes = [8, 1], strides = [1, 1]} : vector<8x34xf32> to vector<8x1xf32>
    %c3 = arith.constant 3 : index
    %c0_23 = arith.constant 0 : index
    %c0_24 = arith.constant 0 : index
    %36 = vector.load %arg7[%c3, %c0_23, %c0_24] : memref<7x32x32xf32, #tpu.memory_space<vmem>>, vector<1x32x32xf32>
    %37 = vector.shape_cast %36 : vector<1x32x32xf32> to vector<32x32xf32>
    %38 = vector.extract_strided_slice %37 {offsets = [0, 0], sizes = [32, 4], strides = [1, 1]} : vector<32x32xf32> to vector<32x4xf32>
    %cst_25 = arith.constant dense<0.000000e+00> : vector<8x4xf32>
    %39 = tpu.matmul %33, %38, %cst_25 {dimension_numbers = #tpu.dot_dimension_numbers<[1], [0], [0], [1], [0, 0, 1, 1], [], []>} : vector<8x32xf32>, vector<32x4xf32>, vector<8x4xf32> -> vector<8x4xf32>
    %c3_26 = arith.constant 3 : index
    %c0_27 = arith.constant 0 : index
    %40 = vector.load %arg6[%c3_26, %c0_27] : memref<9x128xf32, #tpu.memory_space<vmem>>, vector<1x128xf32>
    %41 = vector.extract_strided_slice %40 {offsets = [0, 0], sizes = [1, 4], strides = [1, 1]} : vector<1x128xf32> to vector<1x4xf32>
    %42 = vector.broadcast %41 : vector<1x4xf32> to vector<8x4xf32>
    %43 = arith.addf %39, %42 : vector<8x4xf32>
    %c0_28 = arith.constant 0 : index
    %c0_29 = arith.constant 0 : index
    %44 = vector.load %arg3[%c0_28, %c0_29] : memref<8x8xf32, #tpu.memory_space<vmem>>, vector<8x8xf32>
    %c0_30 = arith.constant 0 : index
    %c0_31 = arith.constant 0 : index
    %c0_32 = arith.constant 0 : index
    %45 = vector.load %arg7[%c0_30, %c0_31, %c0_32] : memref<7x32x32xf32, #tpu.memory_space<vmem>>, vector<1x32x32xf32>
    %46 = vector.shape_cast %45 : vector<1x32x32xf32> to vector<32x32xf32>
    %47 = vector.extract_strided_slice %46 {offsets = [0, 0], sizes = [8, 16], strides = [1, 1]} : vector<32x32xf32> to vector<8x16xf32>
    %cst_33 = arith.constant dense<0.000000e+00> : vector<8x16xf32>
    %48 = tpu.matmul %44, %47, %cst_33 {dimension_numbers = #tpu.dot_dimension_numbers<[1], [0], [0], [1], [0, 0, 1, 1], [], []>} : vector<8x8xf32>, vector<8x16xf32>, vector<8x16xf32> -> vector<8x16xf32>
    %c0_34 = arith.constant 0 : index
    %c0_35 = arith.constant 0 : index
    %49 = vector.load %arg6[%c0_34, %c0_35] : memref<9x128xf32, #tpu.memory_space<vmem>>, vector<1x128xf32>
    %50 = vector.extract_strided_slice %49 {offsets = [0, 0], sizes = [1, 16], strides = [1, 1]} : vector<1x128xf32> to vector<1x16xf32>
    %51 = vector.broadcast %50 : vector<1x16xf32> to vector<8x16xf32>
    %52 = arith.addf %48, %51 : vector<8x16xf32>
    %c4 = arith.constant 4 : index
    %c0_36 = arith.constant 0 : index
    %c0_37 = arith.constant 0 : index
    %53 = vector.load %arg7[%c4, %c0_36, %c0_37] : memref<7x32x32xf32, #tpu.memory_space<vmem>>, vector<1x32x32xf32>
    %54 = vector.shape_cast %53 : vector<1x32x32xf32> to vector<32x32xf32>
    %55 = vector.extract_strided_slice %54 {offsets = [0, 0], sizes = [16, 32], strides = [1, 1]} : vector<32x32xf32> to vector<16x32xf32>
    %c4_38 = arith.constant 4 : index
    %c0_39 = arith.constant 0 : index
    %56 = vector.load %arg6[%c4_38, %c0_39] : memref<9x128xf32, #tpu.memory_space<vmem>>, vector<1x128xf32>
    %57 = vector.extract_strided_slice %56 {offsets = [0, 0], sizes = [1, 32], strides = [1, 1]} : vector<1x128xf32> to vector<1x32xf32>
    %cst_40 = arith.constant dense<0.000000e+00> : vector<8x16xf32>
    %58 = tpu.matmul %1, %52, %cst_40 {dimension_numbers = #tpu.dot_dimension_numbers<[1], [0], [0], [1], [0, 0, 1, 1], [], []>} : vector<8x8xf32>, vector<8x16xf32>, vector<8x16xf32> -> vector<8x16xf32>
    %cst_41 = arith.constant dense<0.000000e+00> : vector<8x32xf32>
    %59 = tpu.matmul %58, %55, %cst_41 {dimension_numbers = #tpu.dot_dimension_numbers<[1], [0], [0], [1], [0, 0, 1, 1], [], []>} : vector<8x16xf32>, vector<16x32xf32>, vector<8x32xf32> -> vector<8x32xf32>
    %60 = vector.broadcast %57 : vector<1x32xf32> to vector<8x32xf32>
    %61 = arith.addf %59, %60 : vector<8x32xf32>
    %cst_42 = arith.constant 0.000000e+00 : f32
    %62 = vector.broadcast %cst_42 : f32 to vector<8x32xf32>
    %63 = arith.maximumf %61, %62 : vector<8x32xf32>
    %c5 = arith.constant 5 : index
    %c0_43 = arith.constant 0 : index
    %c0_44 = arith.constant 0 : index
    %64 = vector.load %arg7[%c5, %c0_43, %c0_44] : memref<7x32x32xf32, #tpu.memory_space<vmem>>, vector<1x32x32xf32>
    %65 = vector.shape_cast %64 : vector<1x32x32xf32> to vector<32x32xf32>
    %c5_45 = arith.constant 5 : index
    %c0_46 = arith.constant 0 : index
    %66 = vector.load %arg6[%c5_45, %c0_46] : memref<9x128xf32, #tpu.memory_space<vmem>>, vector<1x128xf32>
    %67 = vector.extract_strided_slice %66 {offsets = [0, 0], sizes = [1, 32], strides = [1, 1]} : vector<1x128xf32> to vector<1x32xf32>
    %cst_47 = arith.constant dense<0.000000e+00> : vector<8x32xf32>
    %68 = tpu.matmul %63, %65, %cst_47 {dimension_numbers = #tpu.dot_dimension_numbers<[1], [0], [0], [1], [0, 0, 1, 1], [], []>} : vector<8x32xf32>, vector<32x32xf32>, vector<8x32xf32> -> vector<8x32xf32>
    %cst_48 = arith.constant dense<0.000000e+00> : vector<8x32xf32>
    %69 = tpu.matmul %1, %68, %cst_48 {dimension_numbers = #tpu.dot_dimension_numbers<[1], [0], [0], [1], [0, 0, 1, 1], [], []>} : vector<8x8xf32>, vector<8x32xf32>, vector<8x32xf32> -> vector<8x32xf32>
    %70 = vector.broadcast %67 : vector<1x32xf32> to vector<8x32xf32>
    %71 = arith.addf %69, %70 : vector<8x32xf32>
    %cst_49 = arith.constant 0.000000e+00 : f32
    %72 = vector.broadcast %cst_49 : f32 to vector<8x32xf32>
    %73 = arith.maximumf %71, %72 : vector<8x32xf32>
    %c6 = arith.constant 6 : index
    %c0_50 = arith.constant 0 : index
    %c0_51 = arith.constant 0 : index
    %74 = vector.load %arg7[%c6, %c0_50, %c0_51] : memref<7x32x32xf32, #tpu.memory_space<vmem>>, vector<1x32x32xf32>
    %75 = vector.shape_cast %74 : vector<1x32x32xf32> to vector<32x32xf32>
    %76 = vector.extract_strided_slice %75 {offsets = [0, 0], sizes = [32, 4], strides = [1, 1]} : vector<32x32xf32> to vector<32x4xf32>
    %cst_52 = arith.constant dense<0.000000e+00> : vector<8x4xf32>
    %77 = tpu.matmul %73, %76, %cst_52 {dimension_numbers = #tpu.dot_dimension_numbers<[1], [0], [0], [1], [0, 0, 1, 1], [], []>} : vector<8x32xf32>, vector<32x4xf32>, vector<8x4xf32> -> vector<8x4xf32>
    %c6_53 = arith.constant 6 : index
    %c0_54 = arith.constant 0 : index
    %78 = vector.load %arg6[%c6_53, %c0_54] : memref<9x128xf32, #tpu.memory_space<vmem>>, vector<1x128xf32>
    %79 = vector.extract_strided_slice %78 {offsets = [0, 0], sizes = [1, 4], strides = [1, 1]} : vector<1x128xf32> to vector<1x4xf32>
    %80 = vector.broadcast %79 : vector<1x4xf32> to vector<8x4xf32>
    %81 = arith.addf %77, %80 : vector<8x4xf32>
    %c7 = arith.constant 7 : index
    %c0_55 = arith.constant 0 : index
    %82 = vector.load %arg6[%c7, %c0_55] : memref<9x128xf32, #tpu.memory_space<vmem>>, vector<1x128xf32>
    %83 = vector.extract_strided_slice %82 {offsets = [0, 0], sizes = [1, 8], strides = [1, 1]} : vector<1x128xf32> to vector<1x8xf32>
    %c8 = arith.constant 8 : index
    %c0_56 = arith.constant 0 : index
    %84 = vector.load %arg6[%c8, %c0_56] : memref<9x128xf32, #tpu.memory_space<vmem>>, vector<1x128xf32>
    %85 = vector.extract_strided_slice %84 {offsets = [0, 0], sizes = [1, 8], strides = [1, 1]} : vector<1x128xf32> to vector<1x8xf32>
    %86 = tpu.concatenate %43, %81 in 1 : vector<8x4xf32>, vector<8x4xf32> -> vector<8x8xf32>
    %cst_57 = arith.constant dense<0.000000e+00> : vector<8xf32>
    %87 = vector.multi_reduction <add>, %86, %cst_57 [0] : vector<8x8xf32> to vector<8xf32>
    %88 = vector.shape_cast %87 : vector<8xf32> to vector<1x8xf32>
    %cst_58 = arith.constant 8.000000e+00 : f32
    %89 = vector.broadcast %cst_58 : f32 to vector<1x8xf32>
    %90 = arith.divf %88, %89 : vector<1x8xf32>
    %91 = vector.broadcast %90 : vector<1x8xf32> to vector<8x8xf32>
    %92 = arith.subf %86, %91 : vector<8x8xf32>
    %93 = vector.broadcast %90 : vector<1x8xf32> to vector<8x8xf32>
    %94 = arith.subf %86, %93 : vector<8x8xf32>
    %95 = arith.mulf %92, %94 : vector<8x8xf32>
    %cst_59 = arith.constant dense<0.000000e+00> : vector<8xf32>
    %96 = vector.multi_reduction <add>, %95, %cst_59 [0] : vector<8x8xf32> to vector<8xf32>
    %97 = vector.shape_cast %96 : vector<8xf32> to vector<1x8xf32>
    %cst_60 = arith.constant 8.000000e+00 : f32
    %98 = vector.broadcast %cst_60 : f32 to vector<1x8xf32>
    %99 = arith.divf %97, %98 : vector<1x8xf32>
    %100 = vector.broadcast %90 : vector<1x8xf32> to vector<8x8xf32>
    %101 = arith.subf %86, %100 : vector<8x8xf32>
    %cst_61 = arith.constant 9.99999974E-6 : f32
    %102 = vector.broadcast %cst_61 : f32 to vector<1x8xf32>
    %103 = arith.addf %99, %102 : vector<1x8xf32>
    %104 = math.rsqrt %103 : vector<1x8xf32>
    %105 = vector.broadcast %104 : vector<1x8xf32> to vector<8x8xf32>
    %106 = arith.mulf %101, %105 : vector<8x8xf32>
    %107 = vector.broadcast %83 : vector<1x8xf32> to vector<8x8xf32>
    %108 = arith.mulf %106, %107 : vector<8x8xf32>
    %109 = vector.broadcast %85 : vector<1x8xf32> to vector<8x8xf32>
    %110 = arith.addf %108, %109 : vector<8x8xf32>
    %111 = vector.extract_strided_slice %110 {offsets = [0, 0], sizes = [8, 4], strides = [1, 1]} : vector<8x8xf32> to vector<8x4xf32>
    %112 = vector.broadcast %34 : vector<8x1xf32> to vector<8x4xf32>
    %113 = arith.mulf %112, %111 : vector<8x4xf32>
    %114 = vector.extract_strided_slice %110 {offsets = [0, 4], sizes = [8, 4], strides = [1, 1]} : vector<8x8xf32> to vector<8x4xf32>
    %115 = vector.broadcast %35 : vector<8x1xf32> to vector<8x4xf32>
    %116 = arith.mulf %115, %114 : vector<8x4xf32>
    %117 = arith.addf %113, %116 : vector<8x4xf32>
    %c0_62 = arith.constant 0 : index
    %c0_63 = arith.constant 0 : index
    %118 = vector.load %arg8[%c0_62, %c0_63] : memref<8x4xf32, #tpu.memory_space<vmem>>, vector<8x4xf32>
    tpu.vector_store %arg8[%c0_62, %c0_63], %117 {strides = array<i32>} : memref<8x4xf32, #tpu.memory_space<vmem>>, vector<8x4xf32>,
    return
  }
}

</mosaic_0001>

<llo_original>
// kernel: attr_atk_community_forward.1
$region0: #{attr_atk_community_forward.1}
  #allocation0 [shape = 'u32[]', space=smem, size = 0x4, offset = 0x4, fixed_abs, tag = 'smem constant byte address 0x4 - core index']
  #allocation1 [shape = 'u32[144,128]{1,0:T(1,128)}', space=vmem, size = 0x12000, scoped, tag = 'internal scratch']
  %s0 = inlined_call_operand.vmem [shape: f32[16,16], index: 0, kind: input, shape index: {}]
  %s1 = inlined_call_operand.vmem [shape: f32[16,8], index: 1, kind: input, shape index: {}]
  %s2 = inlined_call_operand.vmem [shape: f32[8,8], index: 2, kind: input, shape index: {}]
  %s3 = inlined_call_operand.vmem [shape: f32[8,8], index: 3, kind: input, shape index: {}]
  %s4 = inlined_call_operand.vmem [shape: s32[8,1], index: 4, kind: input, shape index: {}]
  %s5 = inlined_call_operand.vmem [shape: f32[16,2], index: 5, kind: input, shape index: {}]
  %s6 = inlined_call_operand.vmem [shape: f32[9,128], index: 6, kind: input, shape index: {}]
  %s7 = inlined_call_operand.vmem [shape: f32[7,32,32], index: 7, kind: input, shape index: {}]
  %s8 = inlined_call_operand.vmem [shape: f32[8,4], index: 8, kind: output, shape index: {}]
  %s9 = sld [smem:[#allocation0]]
  $region42: #{attr_atk_community_forward.1} parent=0
    _
  %s11 = ssub.s32 1, %s9
  %s12 = scalar_select 0, %s11, %s9
  // Predicated region
  $region2: #{attr_atk_community_forward.1} parent=0 // pred_check
    _
  $region3: #{attr_atk_community_forward.1} parent=0 // pred_check_branch
    %14 = sbr.rel (0) target = $region5
  $region4: #{attr_atk_community_forward.1} parent=0 // pred_region
    _
  $region5: #{attr_atk_community_forward.1} parent=0 // pred_fallthru
    _
  // Predicated region
  $region6: #{attr_atk_community_forward.1} parent=0 // pred_check
    _
  $region7: #{attr_atk_community_forward.1} parent=0 // pred_check_branch
    %16 = sbr.rel (0) target = $region9
  $region8: #{attr_atk_community_forward.1} parent=0 // pred_region
    _
  $region9: #{attr_atk_community_forward.1} parent=0 // pred_fallthru
    _
  // Predicated region
  $region10: #{attr_atk_community_forward.1} parent=0 // pred_check
    _
  $region11: #{attr_atk_community_forward.1} parent=0 // pred_check_branch
    %18 = sbr.rel (0) target = $region13
  $region12: #{attr_atk_community_forward.1} parent=0 // pred_region
    _
  $region13: #{attr_atk_community_forward.1} parent=0 // pred_fallthru
    _
  // Predicated region
  $region14: #{attr_atk_community_forward.1} parent=0 // pred_check
    _
  $region15: #{attr_atk_community_forward.1} parent=0 // pred_check_branch
    %20 = sbr.rel (0) target = $region17
  $region16: #{attr_atk_community_forward.1} parent=0 // pred_region
    _
  $region17: #{attr_atk_community_forward.1} parent=0 // pred_fallthru
    _
  // Predicated region
  $region18: #{attr_atk_community_forward.1} parent=0 // pred_check
    _
  $region19: #{attr_atk_community_forward.1} parent=0 // pred_check_branch
    %22 = sbr.rel (0) target = $region21
  $region20: #{attr_atk_community_forward.1} parent=0 // pred_region
    _
  $region21: #{attr_atk_community_forward.1} parent=0 // pred_fallthru
    _
  // Predicated region
  $region22: #{attr_atk_community_forward.1} parent=0 // pred_check
    _
  $region23: #{attr_atk_community_forward.1} parent=0 // pred_check_branch
    %24 = sbr.rel (0) target = $region25
  $region24: #{attr_atk_community_forward.1} parent=0 // pred_region
    _
  $region25: #{attr_atk_community_forward.1} parent=0 // pred_fallthru
    _
  // Predicated region
  $region26: #{attr_atk_community_forward.1} parent=0 // pred_check
    _
  $region27: #{attr_atk_community_forward.1} parent=0 // pred_check_branch
    %26 = sbr.rel (0) target = $region29
  $region28: #{attr_atk_community_forward.1} parent=0 // pred_region
    _
  $region29: #{attr_atk_community_forward.1} parent=0 // pred_fallthru
    _
  // Predicated region
  $region30: #{attr_atk_community_forward.1} parent=0 // pred_check
    _
  $region31: #{attr_atk_community_forward.1} parent=0 // pred_check_branch
    %28 = sbr.rel (0) target = $region33
  $region32: #{attr_atk_community_forward.1} parent=0 // pred_region
    _
  $region33: #{attr_atk_community_forward.1} parent=0 // pred_fallthru
    _
  %v29 = vld [vmem:[%s0] sm:$0xff]
  %v30 = vld [vmem:[%s0 + $0x8] sm:$0xff]
  %v31 = vld [vmem:[%s2] sm:$0xff]
  %v32 = vld [vmem:[%s4] sm:$0xff]
  %v33 = vld [vmem:[%s5] sm:$0xff]
  %v34 = vld [vmem:[%s5 + $0x8] sm:$0xff]
  %v35 = vld [vmem:[%s1] sm:$0xff]
  %v36 = vld [vmem:[%s1 + $0x8] sm:$0xff]
  %s37 = scalar_lea.vmem %s7, 32
  %v38 = vld [vmem:[%s37] sm:$0xff]
  %v39 = vld [vmem:[%s6 + $0x1] sm:$0x1]
  %vm40 = vcmask 130048
  %v42 = vsel %vm40, %v29, 0
  %v45 = vsel %vm40, %v30, 0
  %47 = vmatprep.subr.mxu0 0.0
  %48 = vmatpush1.msra.mxu0 %v35
  %49 = vmatprep.subr.mxu0 0.0
  %50 = vmatpush1.msra.mxu0 %v36
  %51 = vmatprep.subr.mxu0 0.0
  %52 = vmatpush1.msra.mxu0 0.0
  %53 = vmatprep.subr.mxu0 0.0
  %54 = vmatpush1.msra.mxu0 0.0
  %55 = vmatprep.subr.mxu0 0.0
  %56 = vmatpush1.msra.mxu0 0.0
  %57 = vmatprep.subr.mxu0 0.0
  %58 = vmatpush1.msra.mxu0 0.0
  %59 = vmatprep.subr.mxu0 0.0
  %60 = vmatpush1.msra.mxu0 0.0
  %61 = vmatprep.subr.mxu0 0.0
  %62 = vmatpush1.msra.mxu0 0.0
  %63 = vmatprep.subr.mxu0 0.0
  %64 = vmatpush1.msra.mxu0 0.0
  %65 = vmatprep.subr.mxu0 0.0
  %66 = vmatpush1.msra.mxu0 0.0
  %67 = vmatprep.subr.mxu0 0.0
  %68 = vmatpush1.msra.mxu0 0.0
  %69 = vmatprep.subr.mxu0 0.0
  %70 = vmatpush1.msra.mxu0 0.0
  %71 = vmatprep.subr.mxu0 0.0
  %72 = vmatpush1.msra.mxu0 0.0
  %73 = vmatprep.subr.mxu0 0.0
  %74 = vmatpush1.msra.mxu0 0.0
  %75 = vmatprep.subr.mxu0 0.0
  %76 = vmatpush1.msra.mxu0 0.0
  %77 = vmatprep.subr.mxu0 0.0
  %78 = vmatpush1.msra.mxu0 0.0
  %79 = vmatprep.subr.mxu0 0.0
  %80 = vmatpush1.msra.mxu0 0.0
  %81 = vmatprep.subr.mxu0 0.0
  %82 = vmatpush1.msra.mxu0 0.0
  %83 = vmatprep.subr.mxu0 0.0
  %84 = vmatpush1.msra.mxu0 0.0
  %85 = vmatprep.subr.mxu0 0.0
  %86 = vmatpush1.msra.mxu0 0.0
  %87 = vmatprep.subr.mxu0 0.0
  %88 = vmatpush1.msra.mxu0 0.0
  %89 = vmatprep.subr.mxu0 0.0
  %90 = vmatpush1.msra.mxu0 0.0
  %91 = vmatprep.subr.mxu0 0.0
  %92 = vmatpush1.msra.mxu0 0.0
  %93 = vmatprep.subr.mxu0 0.0
  %94 = vmatpush1.msra.mxu0 0.0
  %95 = vmatprep.subr.mxu0 0.0
  %96 = vmatpush1.msra.mxu0 0.0
  %97 = vmatprep.subr.mxu0 0.0
  %98 = vmatpush1.msra.mxu0 0.0
  %99 = vmatprep.subr.mxu0 0.0
  %100 = vmatpush1.msra.mxu0 0.0
  %101 = vmatprep.subr.mxu0 0.0
  %102 = vmatpush1.msra.mxu0 0.0
  %103 = vmatprep.subr.mxu0 0.0
  %104 = vmatpush1.msra.mxu0 0.0
  %105 = vmatprep.subr.mxu0 0.0
  %106 = vmatpush1.msra.mxu0 0.0
  %107 = vmatprep.subr.mxu0 0.0
  %108 = vmatpush1.msra.mxu0 0.0
  %109 = vmatprep.subr.mxu0 0.0
  %110 = vmatpush1.msra.mxu0 0.0
  %111 = vmatprep.mubr.f32.mxu0 0.0
  %112 = vmatmul.mubr.f32.gmra.mrb[0].mxu0 %v42
  %v113 = vpop.f32.mrb[0].mxu0
  %v114 = vadd.f32 0.0, %v113
  %v115 = vpop.f32.mrb[0].mxu0
  %116 = vmatprep.mubr.f32.mxu0 0.0
  %117 = vmatmul.mubr.f32.gmra.mrb[0].mxu0 %v45
  %v118 = vpop.f32.mrb[0].mxu0
  %v119 = vadd.f32 0.0, %v118
  %v120 = vpop.f32.mrb[0].mxu0
  %121 = vdwg.mxu0
  %v122 = vlaneseq
  %v123 = vshrl.u32 %v122, 7
  %v124 = vsub.s32 0, %v123
  %v125 = vrot.slane %v39, %v124
  %vm126 = vcmask 64512
  %v128 = vsel %vm126, %v114, 0
  %v131 = vsel %vm126, %v119, 0
  %133 = vmatprep.subr.mxu0 0.0
  %134 = vmatpush1.msra.mxu0 %v38
  %135 = vmatprep.subr.mxu0 0.0
  %136 = vmatpush1.msra.mxu0 0.0
  %137 = vmatprep.subr.mxu0 0.0
  %138 = vmatpush1.msra.mxu0 0.0
  %139 = vmatprep.subr.mxu0 0.0
  %140 = vmatpush1.msra.mxu0 0.0
  %141 = vmatprep.subr.mxu0 0.0
  %142 = vmatpush1.msra.mxu0 0.0
  %143 = vmatprep.subr.mxu0 0.0
  %144 = vmatpush1.msra.mxu0 0.0
  %145 = vmatprep.subr.mxu0 0.0
  %146 = vmatpush1.msra.mxu0 0.0
  %147 = vmatprep.subr.mxu0 0.0
  %148 = vmatpush1.msra.mxu0 0.0
  %149 = vmatprep.subr.mxu0 0.0
  %150 = vmatpush1.msra.mxu0 0.0
  %151 = vmatprep.subr.mxu0 0.0
  %152 = vmatpush1.msra.mxu0 0.0
  %153 = vmatprep.subr.mxu0 0.0
  %154 = vmatpush1.msra.mxu0 0.0
  %155 = vmatprep.subr.mxu0 0.0
  %156 = vmatpush1.msra.mxu0 0.0
  %157 = vmatprep.subr.mxu0 0.0
  %158 = vmatpush1.msra.mxu0 0.0
  %159 = vmatprep.subr.mxu0 0.0
  %160 = vmatpush1.msra.mxu0 0.0
  %161 = vmatprep.subr.mxu0 0.0
  %162 = vmatpush1.msra.mxu0 0.0
  %163 = vmatprep.subr.mxu0 0.0
  %164 = vmatpush1.msra.mxu0 0.0
  %165 = vmatprep.subr.mxu0 0.0
  %166 = vmatpush1.msra.mxu0 0.0
  %167 = vmatprep.subr.mxu0 0.0
  %168 = vmatpush1.msra.mxu0 0.0
  %169 = vmatprep.subr.mxu0 0.0
  %170 = vmatpush1.msra.mxu0 0.0
  %171 = vmatprep.subr.mxu0 0.0
  %172 = vmatpush1.msra.mxu0 0.0
  %173 = vmatprep.subr.mxu0 0.0
  %174 = vmatpush1.msra.mxu0 0.0
  %175 = vmatprep.subr.mxu0 0.0
  %176 = vmatpush1.msra.mxu0 0.0
  %177 = vmatprep.subr.mxu0 0.0
  %178 = vmatpush1.msra.mxu0 0.0
  %179 = vmatprep.subr.mxu0 0.0
  %180 = vmatpush1.msra.mxu0 0.0
  %181 = vmatprep.subr.mxu0 0.0
  %182 = vmatpush1.msra.mxu0 0.0
  %183 = vmatprep.subr.mxu0 0.0
  %184 = vmatpush1.msra.mxu0 0.0
  %185 = vmatprep.subr.mxu0 0.0
  %186 = vmatpush1.msra.mxu0 0.0
  %187 = vmatprep.subr.mxu0 0.0
  %188 = vmatpush1.msra.mxu0 0.0
  %189 = vmatprep.subr.mxu0 0.0
  %190 = vmatpush1.msra.mxu0 0.0
  %191 = vmatprep.subr.mxu0 0.0
  %192 = vmatpush1.msra.mxu0 0.0
  %193 = vmatprep.subr.mxu0 0.0
  %194 = vmatpush1.msra.mxu0 0.0
  %195 = vmatprep.subr.mxu0 0.0
  %196 = vmatpush1.msra.mxu0 0.0
  %197 = vmatprep.mubr.f32.mxu0 0.0
  %198 = vmatmul.mubr.f32.gmra.mrb[0].mxu0 %v128
  %v199 = vpop.f32.mrb[0].mxu0
  %v200 = vadd.f32 %v125, %v199
  %v201 = vpop.f32.mrb[0].mxu0
  %202 = vmatprep.mubr.f32.mxu0 0.0
  %203 = vmatmul.mubr.f32.gmra.mrb[0].mxu0 %v131
  %v204 = vpop.f32.mrb[0].mxu0
  %v205 = vadd.f32 %v125, %v204
  %v206 = vpop.f32.mrb[0].mxu0
  %207 = vdwg.mxu0
  %v208 = vmax.f32 %v200, 0.0
  %v209 = vmax.f32 %v205, 0.0
  %s210 = scalar_lea.vmem %s7, 64
  %v211 = vld [vmem:[%s210] sm:$0xff]
  %v212 = vld [vmem:[%s210 + $0x8] sm:$0xff]
  %v213 = vld [vmem:[%s210 + $0x10] sm:$0xff]
  %v214 = vld [vmem:[%s210 + $0x18] sm:$0xff]
  %v215 = vld [vmem:[%s6 + $0x2] sm:$0x1]
  %vm216 = vcmask 261120
  %v218 = vsel %vm216, %v208, 0
  %v221 = vsel %vm216, %v209, 0
  %223 = vmatprep.subr.mxu0 0.0
  %224 = vmatpush1.msra.mxu0 %v211
  %225 = vmatprep.subr.mxu0 0.0
  %226 = vmatpush1.msra.mxu0 %v212
  %227 = vmatprep.subr.mxu0 0.0
  %228 = vmatpush1.msra.mxu0 %v213
  %229 = vmatprep.subr.mxu0 0.0
  %230 = vmatpush1.msra.mxu0 %v214
  %231 = vmatprep.subr.mxu0 0.0
  %232 = vmatpush1.msra.mxu0 0.0
  %233 = vmatprep.subr.mxu0 0.0
  %234 = vmatpush1.msra.mxu0 0.0
  %235 = vmatprep.subr.mxu0 0.0
  %236 = vmatpush1.msra.mxu0 0.0
  %237 = vmatprep.subr.mxu0 0.0
  %238 = vmatpush1.msra.mxu0 0.0
  %239 = vmatprep.subr.mxu0 0.0
  %240 = vmatpush1.msra.mxu0 0.0
  %241 = vmatprep.subr.mxu0 0.0
  %242 = vmatpush1.msra.mxu0 0.0
  %243 = vmatprep.subr.mxu0 0.0
  %244 = vmatpush1.msra.mxu0 0.0
  %245 = vmatprep.subr.mxu0 0.0
  %246 = vmatpush1.msra.mxu0 0.0
  %247 = vmatprep.subr.mxu0 0.0
  %248 = vmatpush1.msra.mxu0 0.0
  %249 = vmatprep.subr.mxu0 0.0
  %250 = vmatpush1.msra.mxu0 0.0
  %251 = vmatprep.subr.mxu0 0.0
  %252 = vmatpush1.msra.mxu0 0.0
  %253 = vmatprep.subr.mxu0 0.0
  %254 = vmatpush1.msra.mxu0 0.0
  %255 = vmatprep.subr.mxu0 0.0
  %256 = vmatpush1.msra.mxu0 0.0
  %257 = vmatprep.subr.mxu0 0.0
  %258 = vmatpush1.msra.mxu0 0.0
  %259 = vmatprep.subr.mxu0 0.0
  %260 = vmatpush1.msra.mxu0 0.0
  %261 = vmatprep.subr.mxu0 0.0
  %262 = vmatpush1.msra.mxu0 0.0
  %263 = vmatprep.subr.mxu0 0.0
  %264 = vmatpush1.msra.mxu0 0.0
  %265 = vmatprep.subr.mxu0 0.0
  %266 = vmatpush1.msra.mxu0 0.0
  %267 = vmatprep.subr.mxu0 0.0
  %268 = vmatpush1.msra.mxu0 0.0
  %269 = vmatprep.subr.mxu0 0.0
  %270 = vmatpush1.msra.mxu0 0.0
  %271 = vmatprep.subr.mxu0 0.0
  %272 = vmatpush1.msra.mxu0 0.0
  %273 = vmatprep.subr.mxu0 0.0
  %274 = vmatpush1.msra.mxu0 0.0
  %275 = vmatprep.subr.mxu0 0.0
  %276 = vmatpush1.msra.mxu0 0.0
  %277 = vmatprep.subr.mxu0 0.0
  %278 = vmatpush1.msra.mxu0 0.0
  %279 = vmatprep.subr.mxu0 0.0
  %280 = vmatpush1.msra.mxu0 0.0
  %281 = vmatprep.subr.mxu0 0.0
  %282 = vmatpush1.msra.mxu0 0.0
  %283 = vmatprep.subr.mxu0 0.0
  %284 = vmatpush1.msra.mxu0 0.0
  %285 = vmatprep.subr.mxu0 0.0
  %286 = vmatpush1.msra.mxu0 0.0
  %287 = vmatprep.mubr.f32.mxu0 0.0
  %288 = vmatmul.mubr.f32.gmra.mrb[0].mxu0 %v218
  %v289 = vpop.f32.mrb[0].mxu0
  %v290 = vadd.f32 0.0, %v289
  %v291 = vpop.f32.mrb[0].mxu0
  %292 = vmatprep.mubr.f32.mxu0 0.0
  %293 = vmatmul.mubr.f32.gmra.mrb[0].mxu0 %v221
  %v294 = vpop.f32.mrb[0].mxu0
  %v295 = vadd.f32 0.0, %v294
  %v296 = vpop.f32.mrb[0].mxu0
  %297 = vdwg.mxu0
  %v298 = vlaneseq
  %v299 = vshrl.u32 %v298, 7
  %v300 = vsub.s32 0, %v299
  %v301 = vrot.slane %v215, %v300
  %302 = vmatprep.subr.mxu0 0.0
  %303 = vmatpush1.msra.mxu0 %v290
  %304 = vmatprep.subr.mxu0 0.0
  %305 = vmatpush1.msra.mxu0 %v295
  %306 = vmatprep.subr.mxu0 0.0
  %307 = vmatpush1.msra.mxu0 0.0
  %308 = vmatprep.subr.mxu0 0.0
  %309 = vmatpush1.msra.mxu0 0.0
  %310 = vmatprep.subr.mxu0 0.0
  %311 = vmatpush1.msra.mxu0 0.0
  %312 = vmatprep.subr.mxu0 0.0
  %313 = vmatpush1.msra.mxu0 0.0
  %314 = vmatprep.subr.mxu0 0.0
  %315 = vmatpush1.msra.mxu0 0.0
  %316 = vmatprep.subr.mxu0 0.0
  %317 = vmatpush1.msra.mxu0 0.0
  %318 = vmatprep.subr.mxu0 0.0
  %319 = vmatpush1.msra.mxu0 0.0
  %320 = vmatprep.subr.mxu0 0.0
  %321 = vmatpush1.msra.mxu0 0.0
  %322 = vmatprep.subr.mxu0 0.0
  %323 = vmatpush1.msra.mxu0 0.0
  %324 = vmatprep.subr.mxu0 0.0
  %325 = vmatpush1.msra.mxu0 0.0
  %326 = vmatprep.subr.mxu0 0.0
  %327 = vmatpush1.msra.mxu0 0.0
  %328 = vmatprep.subr.mxu0 0.0
  %329 = vmatpush1.msra.mxu0 0.0
  %330 = vmatprep.subr.mxu0 0.0
  %331 = vmatpush1.msra.mxu0 0.0
  %332 = vmatprep.subr.mxu0 0.0
  %333 = vmatpush1.msra.mxu0 0.0
  %334 = vmatprep.subr.mxu0 0.0
  %335 = vmatpush1.msra.mxu0 0.0
  %336 = vmatprep.subr.mxu0 0.0
  %337 = vmatpush1.msra.mxu0 0.0
  %338 = vmatprep.subr.mxu0 0.0
  %339 = vmatpush1.msra.mxu0 0.0
  %340 = vmatprep.subr.mxu0 0.0
  %341 = vmatpush1.msra.mxu0 0.0
  %342 = vmatprep.subr.mxu0 0.0
  %343 = vmatpush1.msra.mxu0 0.0
  %344 = vmatprep.subr.mxu0 0.0
  %345 = vmatpush1.msra.mxu0 0.0
  %346 = vmatprep.subr.mxu0 0.0
  %347 = vmatpush1.msra.mxu0 0.0
  %348 = vmatprep.subr.mxu0 0.0
  %349 = vmatpush1.msra.mxu0 0.0
  %350 = vmatprep.subr.mxu0 0.0
  %351 = vmatpush1.msra.mxu0 0.0
  %352 = vmatprep.subr.mxu0 0.0
  %353 = vmatpush1.msra.mxu0 0.0
  %354 = vmatprep.subr.mxu0 0.0
  %355 = vmatpush1.msra.mxu0 0.0
  %356 = vmatprep.subr.mxu0 0.0
  %357 = vmatpush1.msra.mxu0 0.0
  %358 = vmatprep.subr.mxu0 0.0
  %359 = vmatpush1.msra.mxu0 0.0
  %360 = vmatprep.subr.mxu0 0.0
  %361 = vmatpush1.msra.mxu0 0.0
  %362 = vmatprep.subr.mxu0 0.0
  %363 = vmatpush1.msra.mxu0 0.0
  %364 = vmatprep.subr.mxu0 0.0
  %365 = vmatpush1.msra.mxu0 0.0
  %366 = vmatprep.mubr.f32.mxu0 0.0
  %367 = vmatmul.mubr.f32.gmra.mrb[0].mxu0 %v42
  %v368 = vpop.f32.mrb[0].mxu0
  %v369 = vadd.f32 %v301, %v368
  %v370 = vpop.f32.mrb[0].mxu0
  %371 = vmatprep.mubr.f32.mxu0 0.0
  %372 = vmatmul.mubr.f32.gmra.mrb[0].mxu0 %v45
  %v373 = vpop.f32.mrb[0].mxu0
  %v374 = vadd.f32 %v301, %v373
  %v375 = vpop.f32.mrb[0].mxu0
  %376 = vdwg.mxu0
  %v377 = vmax.f32 %v369, 0.0
  %v378 = vmax.f32 %v374, 0.0
  %v379 = vlaneseq
  %v380 = vand.u32 %v379, 127
  %381 = vset.pattern.permute.xlu0 0
  %382 = vperm.xlu0 %381, %v32
  %v383 = vpop.permute.xlu0 %382
  %vm384 = vcmp.eq.s32.totalorder %v380, %v383
  %v385 = vsel %vm384, 1, 0
  %v386 = vcvt.s32.f32 %v385
  %389 = vrot.lane.b32.xlu0 %v33, 32
  %v390 = vpop.permute.xlu0 %389
  %391 = vrot.lane.b32.xlu0 %v34, 32
  %v392 = vpop.permute.xlu0 %391
  %v395 = vsel %vm216, %v377, %v390
  %v396 = vsel %vm216, %v378, %v392
  %v398 = vsel %vm40, %v386, 0
  %400 = vmatprep.subr.mxu0 0.0
  %401 = vmatpush1.msra.mxu0 %v395
  %402 = vmatprep.subr.mxu0 0.0
  %403 = vmatpush1.msra.mxu0 %v396
  %404 = vmatprep.subr.mxu0 0.0
  %405 = vmatpush1.msra.mxu0 0.0
  %406 = vmatprep.subr.mxu0 0.0
  %407 = vmatpush1.msra.mxu0 0.0
  %408 = vmatprep.subr.mxu0 0.0
  %409 = vmatpush1.msra.mxu0 0.0
  %410 = vmatprep.subr.mxu0 0.0
  %411 = vmatpush1.msra.mxu0 0.0
  %412 = vmatprep.subr.mxu0 0.0
  %413 = vmatpush1.msra.mxu0 0.0
  %414 = vmatprep.subr.mxu0 0.0
  %415 = vmatpush1.msra.mxu0 0.0
  %416 = vmatprep.subr.mxu0 0.0
  %417 = vmatpush1.msra.mxu0 0.0
  %418 = vmatprep.subr.mxu0 0.0
  %419 = vmatpush1.msra.mxu0 0.0
  %420 = vmatprep.subr.mxu0 0.0
  %421 = vmatpush1.msra.mxu0 0.0
  %422 = vmatprep.subr.mxu0 0.0
  %423 = vmatpush1.msra.mxu0 0.0
  %424 = vmatprep.subr.mxu0 0.0
  %425 = vmatpush1.msra.mxu0 0.0
  %426 = vmatprep.subr.mxu0 0.0
  %427 = vmatpush1.msra.mxu0 0.0
  %428 = vmatprep.subr.mxu0 0.0
  %429 = vmatpush1.msra.mxu0 0.0
  %430 = vmatprep.subr.mxu0 0.0
  %431 = vmatpush1.msra.mxu0 0.0
  %432 = vmatprep.subr.mxu0 0.0
  %433 = vmatpush1.msra.mxu0 0.0
  %434 = vmatprep.subr.mxu0 0.0
  %435 = vmatpush1.msra.mxu0 0.0
  %436 = vmatprep.subr.mxu0 0.0
  %437 = vmatpush1.msra.mxu0 0.0
  %438 = vmatprep.subr.mxu0 0.0
  %439 = vmatpush1.msra.mxu0 0.0
  %440 = vmatprep.subr.mxu0 0.0
  %441 = vmatpush1.msra.mxu0 0.0
  %442 = vmatprep.subr.mxu0 0.0
  %443 = vmatpush1.msra.mxu0 0.0
  %444 = vmatprep.subr.mxu0 0.0
  %445 = vmatpush1.msra.mxu0 0.0
  %446 = vmatprep.subr.mxu0 0.0
  %447 = vmatpush1.msra.mxu0 0.0
  %448 = vmatprep.subr.mxu0 0.0
  %449 = vmatpush1.msra.mxu0 0.0
  %450 = vmatprep.subr.mxu0 0.0
  %451 = vmatpush1.msra.mxu0 0.0
  %452 = vmatprep.subr.mxu0 0.0
  %453 = vmatpush1.msra.mxu0 0.0
  %454 = vmatprep.subr.mxu0 0.0
  %455 = vmatpush1.msra.mxu0 0.0
  %456 = vmatprep.subr.mxu0 0.0
  %457 = vmatpush1.msra.mxu0 0.0
  %458 = vmatprep.subr.mxu0 0.0
  %459 = vmatpush1.msra.mxu0 0.0
  %460 = vmatprep.subr.mxu0 0.0
  %461 = vmatpush1.msra.mxu0 0.0
  %462 = vmatprep.subr.mxu0 0.0
  %463 = vmatpush1.msra.mxu0 0.0
  %464 = vmatprep.mubr.f32.mxu0 0.0
  %465 = vmatmul.mubr.f32.gmra.mrb[0].mxu0 %v398
  %v466 = vpop.f32.mrb[0].mxu0
  %v467 = vadd.f32 0.0, %v466
  %v468 = vpop.f32.mrb[0].mxu0
  %469 = vdwg.mxu0
  %s470 = scalar_lea.vmem %s7, 96
  %v471 = vld [vmem:[%s470] sm:$0xff]
  %v472 = vld [vmem:[%s470 + $0x8] sm:$0xff]
  %v473 = vld [vmem:[%s470 + $0x10] sm:$0xff]
  %v474 = vld [vmem:[%s470 + $0x18] sm:$0xff]
  %v475 = vld [vmem:[%s6 + $0x3] sm:$0x1]
  %v476 = vlaneseq
  %v477 = vshrl.u32 %v476, 7
  %v478 = vsub.s32 0, %v477
  %v479 = vrot.slane %v475, %v478
  %v481 = vsel %vm216, %v467, 0
  %483 = vmatprep.subr.mxu0 0.0
  %484 = vmatpush1.msra.mxu0 %v471
  %485 = vmatprep.subr.mxu0 0.0
  %486 = vmatpush1.msra.mxu0 %v472
  %487 = vmatprep.subr.mxu0 0.0
  %488 = vmatpush1.msra.mxu0 %v473
  %489 = vmatprep.subr.mxu0 0.0
  %490 = vmatpush1.msra.mxu0 %v474
  %491 = vmatprep.subr.mxu0 0.0
  %492 = vmatpush1.msra.mxu0 0.0
  %493 = vmatprep.subr.mxu0 0.0
  %494 = vmatpush1.msra.mxu0 0.0
  %495 = vmatprep.subr.mxu0 0.0
  %496 = vmatpush1.msra.mxu0 0.0
  %497 = vmatprep.subr.mxu0 0.0
  %498 = vmatpush1.msra.mxu0 0.0
  %499 = vmatprep.subr.mxu0 0.0
  %500 = vmatpush1.msra.mxu0 0.0
  %501 = vmatprep.subr.mxu0 0.0
  %502 = vmatpush1.msra.mxu0 0.0
  %503 = vmatprep.subr.mxu0 0.0
  %504 = vmatpush1.msra.mxu0 0.0
  %505 = vmatprep.subr.mxu0 0.0
  %506 = vmatpush1.msra.mxu0 0.0
  %507 = vmatprep.subr.mxu0 0.0
  %508 = vmatpush1.msra.mxu0 0.0
  %509 = vmatprep.subr.mxu0 0.0
  %510 = vmatpush1.msra.mxu0 0.0
  %511 = vmatprep.subr.mxu0 0.0
  %512 = vmatpush1.msra.mxu0 0.0
  %513 = vmatprep.subr.mxu0 0.0
  %514 = vmatpush1.msra.mxu0 0.0
  %515 = vmatprep.subr.mxu0 0.0
  %516 = vmatpush1.msra.mxu0 0.0
  %517 = vmatprep.subr.mxu0 0.0
  %518 = vmatpush1.msra.mxu0 0.0
  %519 = vmatprep.subr.mxu0 0.0
  %520 = vmatpush1.msra.mxu0 0.0
  %521 = vmatprep.subr.mxu0 0.0
  %522 = vmatpush1.msra.mxu0 0.0
  %523 = vmatprep.subr.mxu0 0.0
  %524 = vmatpush1.msra.mxu0 0.0
  %525 = vmatprep.subr.mxu0 0.0
  %526 = vmatpush1.msra.mxu0 0.0
  %527 = vmatprep.subr.mxu0 0.0
  %528 = vmatpush1.msra.mxu0 0.0
  %529 = vmatprep.subr.mxu0 0.0
  %530 = vmatpush1.msra.mxu0 0.0
  %531 = vmatprep.subr.mxu0 0.0
  %532 = vmatpush1.msra.mxu0 0.0
  %533 = vmatprep.subr.mxu0 0.0
  %534 = vmatpush1.msra.mxu0 0.0
  %535 = vmatprep.subr.mxu0 0.0
  %536 = vmatpush1.msra.mxu0 0.0
  %537 = vmatprep.subr.mxu0 0.0
  %538 = vmatpush1.msra.mxu0 0.0
  %539 = vmatprep.subr.mxu0 0.0
  %540 = vmatpush1.msra.mxu0 0.0
  %541 = vmatprep.subr.mxu0 0.0
  %542 = vmatpush1.msra.mxu0 0.0
  %543 = vmatprep.subr.mxu0 0.0
  %544 = vmatpush1.msra.mxu0 0.0
  %545 = vmatprep.subr.mxu0 0.0
  %546 = vmatpush1.msra.mxu0 0.0
  %547 = vmatprep.mubr.f32.mxu0 0.0
  %548 = vmatmul.mubr.f32.gmra.mrb[0].mxu0 %v481
  %v549 = vpop.f32.mrb[0].mxu0
  %v550 = vadd.f32 %v479, %v549
  %v551 = vpop.f32.mrb[0].mxu0
  %552 = vdwg.mxu0
  %v553 = vld [vmem:[%s3] sm:$0xff]
  %v554 = vld [vmem:[%s7] sm:$0xff]
  %v555 = vld [vmem:[%s6] sm:$0x1]
  %v556 = vlaneseq
  %v557 = vshrl.u32 %v556, 7
  %v558 = vsub.s32 0, %v557
  %v559 = vrot.slane %v555, %v558
  %v561 = vsel %vm126, %v553, 0
  %563 = vmatprep.subr.mxu0 0.0
  %564 = vmatpush1.msra.mxu0 %v554
  %565 = vmatprep.subr.mxu0 0.0
  %566 = vmatpush1.msra.mxu0 0.0
  %567 = vmatprep.subr.mxu0 0.0
  %568 = vmatpush1.msra.mxu0 0.0
  %569 = vmatprep.subr.mxu0 0.0
  %570 = vmatpush1.msra.mxu0 0.0
  %571 = vmatprep.subr.mxu0 0.0
  %572 = vmatpush1.msra.mxu0 0.0
  %573 = vmatprep.subr.mxu0 0.0
  %574 = vmatpush1.msra.mxu0 0.0
  %575 = vmatprep.subr.mxu0 0.0
  %576 = vmatpush1.msra.mxu0 0.0
  %577 = vmatprep.subr.mxu0 0.0
  %578 = vmatpush1.msra.mxu0 0.0
  %579 = vmatprep.subr.mxu0 0.0
  %580 = vmatpush1.msra.mxu0 0.0
  %581 = vmatprep.subr.mxu0 0.0
  %582 = vmatpush1.msra.mxu0 0.0
  %583 = vmatprep.subr.mxu0 0.0
  %584 = vmatpush1.msra.mxu0 0.0
  %585 = vmatprep.subr.mxu0 0.0
  %586 = vmatpush1.msra.mxu0 0.0
  %587 = vmatprep.subr.mxu0 0.0
  %588 = vmatpush1.msra.mxu0 0.0
  %589 = vmatprep.subr.mxu0 0.0
  %590 = vmatpush1.msra.mxu0 0.0
  %591 = vmatprep.subr.mxu0 0.0
  %592 = vmatpush1.msra.mxu0 0.0
  %593 = vmatprep.subr.mxu0 0.0
  %594 = vmatpush1.msra.mxu0 0.0
  %595 = vmatprep.subr.mxu0 0.0
  %596 = vmatpush1.msra.mxu0 0.0
  %597 = vmatprep.subr.mxu0 0.0
  %598 = vmatpush1.msra.mxu0 0.0
  %599 = vmatprep.subr.mxu0 0.0
  %600 = vmatpush1.msra.mxu0 0.0
  %601 = vmatprep.subr.mxu0 0.0
  %602 = vmatpush1.msra.mxu0 0.0
  %603 = vmatprep.subr.mxu0 0.0
  %604 = vmatpush1.msra.mxu0 0.0
  %605 = vmatprep.subr.mxu0 0.0
  %606 = vmatpush1.msra.mxu0 0.0
  %607 = vmatprep.subr.mxu0 0.0
  %608 = vmatpush1.msra.mxu0 0.0
  %609 = vmatprep.subr.mxu0 0.0
  %610 = vmatpush1.msra.mxu0 0.0
  %611 = vmatprep.subr.mxu0 0.0
  %612 = vmatpush1.msra.mxu0 0.0
  %613 = vmatprep.subr.mxu0 0.0
  %614 = vmatpush1.msra.mxu0 0.0
  %615 = vmatprep.subr.mxu0 0.0
  %616 = vmatpush1.msra.mxu0 0.0
  %617 = vmatprep.subr.mxu0 0.0
  %618 = vmatpush1.msra.mxu0 0.0
  %619 = vmatprep.subr.mxu0 0.0
  %620 = vmatpush1.msra.mxu0 0.0
  %621 = vmatprep.subr.mxu0 0.0
  %622 = vmatpush1.msra.mxu0 0.0
  %623 = vmatprep.subr.mxu0 0.0
  %624 = vmatpush1.msra.mxu0 0.0
  %625 = vmatprep.subr.mxu0 0.0
  %626 = vmatpush1.msra.mxu0 0.0
  %627 = vmatprep.mubr.f32.mxu0 0.0
  %628 = vmatmul.mubr.f32.gmra.mrb[0].mxu0 %v561
  %v629 = vpop.f32.mrb[0].mxu0
  %v630 = vadd.f32 %v559, %v629
  %v631 = vpop.f32.mrb[0].mxu0
  %632 = vdwg.mxu0
  %s633 = scalar_lea.vmem %s7, 128
  %v634 = vld [vmem:[%s633] sm:$0xff]
  %v635 = vld [vmem:[%s633 + $0x8] sm:$0xff]
  %v636 = vld [vmem:[%s6 + $0x4] sm:$0x1]
  %v638 = vsel %vm126, %v31, 0
  %640 = vmatprep.subr.mxu0 0.0
  %641 = vmatpush1.msra.mxu0 %v630
  %642 = vmatprep.subr.mxu0 0.0
  %643 = vmatpush1.msra.mxu0 0.0
  %644 = vmatprep.subr.mxu0 0.0
  %645 = vmatpush1.msra.mxu0 0.0
  %646 = vmatprep.subr.mxu0 0.0
  %647 = vmatpush1.msra.mxu0 0.0
  %648 = vmatprep.subr.mxu0 0.0
  %649 = vmatpush1.msra.mxu0 0.0
  %650 = vmatprep.subr.mxu0 0.0
  %651 = vmatpush1.msra.mxu0 0.0
  %652 = vmatprep.subr.mxu0 0.0
  %653 = vmatpush1.msra.mxu0 0.0
  %654 = vmatprep.subr.mxu0 0.0
  %655 = vmatpush1.msra.mxu0 0.0
  %656 = vmatprep.subr.mxu0 0.0
  %657 = vmatpush1.msra.mxu0 0.0
  %658 = vmatprep.subr.mxu0 0.0
  %659 = vmatpush1.msra.mxu0 0.0
  %660 = vmatprep.subr.mxu0 0.0
  %661 = vmatpush1.msra.mxu0 0.0
  %662 = vmatprep.subr.mxu0 0.0
  %663 = vmatpush1.msra.mxu0 0.0
  %664 = vmatprep.subr.mxu0 0.0
  %665 = vmatpush1.msra.mxu0 0.0
  %666 = vmatprep.subr.mxu0 0.0
  %667 = vmatpush1.msra.mxu0 0.0
  %668 = vmatprep.subr.mxu0 0.0
  %669 = vmatpush1.msra.mxu0 0.0
  %670 = vmatprep.subr.mxu0 0.0
  %671 = vmatpush1.msra.mxu0 0.0
  %672 = vmatprep.subr.mxu0 0.0
  %673 = vmatpush1.msra.mxu0 0.0
  %674 = vmatprep.subr.mxu0 0.0
  %675 = vmatpush1.msra.mxu0 0.0
  %676 = vmatprep.subr.mxu0 0.0
  %677 = vmatpush1.msra.mxu0 0.0
  %678 = vmatprep.subr.mxu0 0.0
  %679 = vmatpush1.msra.mxu0 0.0
  %680 = vmatprep.subr.mxu0 0.0
  %681 = vmatpush1.msra.mxu0 0.0
  %682 = vmatprep.subr.mxu0 0.0
  %683 = vmatpush1.msra.mxu0 0.0
  %684 = vmatprep.subr.mxu0 0.0
  %685 = vmatpush1.msra.mxu0 0.0
  %686 = vmatprep.subr.mxu0 0.0
  %687 = vmatpush1.msra.mxu0 0.0
  %688 = vmatprep.subr.mxu0 0.0
  %689 = vmatpush1.msra.mxu0 0.0
  %690 = vmatprep.subr.mxu0 0.0
  %691 = vmatpush1.msra.mxu0 0.0
  %692 = vmatprep.subr.mxu0 0.0
  %693 = vmatpush1.msra.mxu0 0.0
  %694 = vmatprep.subr.mxu0 0.0
  %695 = vmatpush1.msra.mxu0 0.0
  %696 = vmatprep.subr.mxu0 0.0
  %697 = vmatpush1.msra.mxu0 0.0
  %698 = vmatprep.subr.mxu0 0.0
  %699 = vmatpush1.msra.mxu0 0.0
  %700 = vmatprep.subr.mxu0 0.0
  %701 = vmatpush1.msra.mxu0 0.0
  %702 = vmatprep.subr.mxu0 0.0
  %703 = vmatpush1.msra.mxu0 0.0
  %704 = vmatprep.mubr.f32.mxu0 0.0
  %705 = vmatmul.mubr.f32.gmra.mrb[0].mxu0 %v638
  %v706 = vpop.f32.mrb[0].mxu0
  %v707 = vadd.f32 0.0, %v706
  %v708 = vpop.f32.mrb[0].mxu0
  %709 = vdwg.mxu0
  %v710 = vlaneseq
  %v711 = vshrl.u32 %v710, 7
  %v712 = vsub.s32 0, %v711
  %v713 = vrot.slane %v636, %v712
  %v715 = vsel %vm40, %v707, 0
  %717 = vmatprep.subr.mxu0 0.0
  %718 = vmatpush1.msra.mxu0 %v634
  %719 = vmatprep.subr.mxu0 0.0
  %720 = vmatpush1.msra.mxu0 %v635
  %721 = vmatprep.subr.mxu0 0.0
  %722 = vmatpush1.msra.mxu0 0.0
  %723 = vmatprep.subr.mxu0 0.0
  %724 = vmatpush1.msra.mxu0 0.0
  %725 = vmatprep.subr.mxu0 0.0
  %726 = vmatpush1.msra.mxu0 0.0
  %727 = vmatprep.subr.mxu0 0.0
  %728 = vmatpush1.msra.mxu0 0.0
  %729 = vmatprep.subr.mxu0 0.0
  %730 = vmatpush1.msra.mxu0 0.0
  %731 = vmatprep.subr.mxu0 0.0
  %732 = vmatpush1.msra.mxu0 0.0
  %733 = vmatprep.subr.mxu0 0.0
  %734 = vmatpush1.msra.mxu0 0.0
  %735 = vmatprep.subr.mxu0 0.0
  %736 = vmatpush1.msra.mxu0 0.0
  %737 = vmatprep.subr.mxu0 0.0
  %738 = vmatpush1.msra.mxu0 0.0
  %739 = vmatprep.subr.mxu0 0.0
  %740 = vmatpush1.msra.mxu0 0.0
  %741 = vmatprep.subr.mxu0 0.0
  %742 = vmatpush1.msra.mxu0 0.0
  %743 = vmatprep.subr.mxu0 0.0
  %744 = vmatpush1.msra.mxu0 0.0
  %745 = vmatprep.subr.mxu0 0.0
  %746 = vmatpush1.msra.mxu0 0.0
  %747 = vmatprep.subr.mxu0 0.0
  %748 = vmatpush1.msra.mxu0 0.0
  %749 = vmatprep.subr.mxu0 0.0
  %750 = vmatpush1.msra.mxu0 0.0
  %751 = vmatprep.subr.mxu0 0.0
  %752 = vmatpush1.msra.mxu0 0.0
  %753 = vmatprep.subr.mxu0 0.0
  %754 = vmatpush1.msra.mxu0 0.0
  %755 = vmatprep.subr.mxu0 0.0
  %756 = vmatpush1.msra.mxu0 0.0
  %757 = vmatprep.subr.mxu0 0.0
  %758 = vmatpush1.msra.mxu0 0.0
  %759 = vmatprep.subr.mxu0 0.0
  %760 = vmatpush1.msra.mxu0 0.0
  %761 = vmatprep.subr.mxu0 0.0
  %762 = vmatpush1.msra.mxu0 0.0
  %763 = vmatprep.subr.mxu0 0.0
  %764 = vmatpush1.msra.mxu0 0.0
  %765 = vmatprep.subr.mxu0 0.0
  %766 = vmatpush1.msra.mxu0 0.0
  %767 = vmatprep.subr.mxu0 0.0
  %768 = vmatpush1.msra.mxu0 0.0
  %769 = vmatprep.subr.mxu0 0.0
  %770 = vmatpush1.msra.mxu0 0.0
  %771 = vmatprep.subr.mxu0 0.0
  %772 = vmatpush1.msra.mxu0 0.0
  %773 = vmatprep.subr.mxu0 0.0
  %774 = vmatpush1.msra.mxu0 0.0
  %775 = vmatprep.subr.mxu0 0.0
  %776 = vmatpush1.msra.mxu0 0.0
  %777 = vmatprep.subr.mxu0 0.0
  %778 = vmatpush1.msra.mxu0 0.0
  %779 = vmatprep.subr.mxu0 0.0
  %780 = vmatpush1.msra.mxu0 0.0
  %781 = vmatprep.mubr.f32.mxu0 0.0
  %782 = vmatmul.mubr.f32.gmra.mrb[0].mxu0 %v715
  %v783 = vpop.f32.mrb[0].mxu0
  %v784 = vadd.f32 %v713, %v783
  %v785 = vpop.f32.mrb[0].mxu0
  %786 = vdwg.mxu0
  %v787 = vmax.f32 %v784, 0.0
  %s788 = scalar_lea.vmem %s7, 160
  %v789 = vld [vmem:[%s788] sm:$0xff]
  %v790 = vld [vmem:[%s788 + $0x8] sm:$0xff]
  %v791 = vld [vmem:[%s788 + $0x10] sm:$0xff]
  %v792 = vld [vmem:[%s788 + $0x18] sm:$0xff]
  %v793 = vld [vmem:[%s6 + $0x5] sm:$0x1]
  %v795 = vsel %vm216, %v787, 0
  %797 = vmatprep.subr.mxu0 0.0
  %798 = vmatpush1.msra.mxu0 %v789
  %799 = vmatprep.subr.mxu0 0.0
  %800 = vmatpush1.msra.mxu0 %v790
  %801 = vmatprep.subr.mxu0 0.0
  %802 = vmatpush1.msra.mxu0 %v791
  %803 = vmatprep.subr.mxu0 0.0
  %804 = vmatpush1.msra.mxu0 %v792
  %805 = vmatprep.subr.mxu0 0.0
  %806 = vmatpush1.msra.mxu0 0.0
  %807 = vmatprep.subr.mxu0 0.0
  %808 = vmatpush1.msra.mxu0 0.0
  %809 = vmatprep.subr.mxu0 0.0
  %810 = vmatpush1.msra.mxu0 0.0
  %811 = vmatprep.subr.mxu0 0.0
  %812 = vmatpush1.msra.mxu0 0.0
  %813 = vmatprep.subr.mxu0 0.0
  %814 = vmatpush1.msra.mxu0 0.0
  %815 = vmatprep.subr.mxu0 0.0
  %816 = vmatpush1.msra.mxu0 0.0
  %817 = vmatprep.subr.mxu0 0.0
  %818 = vmatpush1.msra.mxu0 0.0
  %819 = vmatprep.subr.mxu0 0.0
  %820 = vmatpush1.msra.mxu0 0.0
  %821 = vmatprep.subr.mxu0 0.0
  %822 = vmatpush1.msra.mxu0 0.0
  %823 = vmatprep.subr.mxu0 0.0
  %824 = vmatpush1.msra.mxu0 0.0
  %825 = vmatprep.subr.mxu0 0.0
  %826 = vmatpush1.msra.mxu0 0.0
  %827 = vmatprep.subr.mxu0 0.0
  %828 = vmatpush1.msra.mxu0 0.0
  %829 = vmatprep.subr.mxu0 0.0
  %830 = vmatpush1.msra.mxu0 0.0
  %831 = vmatprep.subr.mxu0 0.0
  %832 = vmatpush1.msra.mxu0 0.0
  %833 = vmatprep.subr.mxu0 0.0
  %834 = vmatpush1.msra.mxu0 0.0
  %835 = vmatprep.subr.mxu0 0.0
  %836 = vmatpush1.msra.mxu0 0.0
  %837 = vmatprep.subr.mxu0 0.0
  %838 = vmatpush1.msra.mxu0 0.0
  %839 = vmatprep.subr.mxu0 0.0
  %840 = vmatpush1.msra.mxu0 0.0
  %841 = vmatprep.subr.mxu0 0.0
  %842 = vmatpush1.msra.mxu0 0.0
  %843 = vmatprep.subr.mxu0 0.0
  %844 = vmatpush1.msra.mxu0 0.0
  %845 = vmatprep.subr.mxu0 0.0
  %846 = vmatpush1.msra.mxu0 0.0
  %847 = vmatprep.subr.mxu0 0.0
  %848 = vmatpush1.msra.mxu0 0.0
  %849 = vmatprep.subr.mxu0 0.0
  %850 = vmatpush1.msra.mxu0 0.0
  %851 = vmatprep.subr.mxu0 0.0
  %852 = vmatpush1.msra.mxu0 0.0
  %853 = vmatprep.subr.mxu0 0.0
  %854 = vmatpush1.msra.mxu0 0.0
  %855 = vmatprep.subr.mxu0 0.0
  %856 = vmatpush1.msra.mxu0 0.0
  %857 = vmatprep.subr.mxu0 0.0
  %858 = vmatpush1.msra.mxu0 0.0
  %859 = vmatprep.subr.mxu0 0.0
  %860 = vmatpush1.msra.mxu0 0.0
  %861 = vmatprep.mubr.f32.mxu0 0.0
  %862 = vmatmul.mubr.f32.gmra.mrb[0].mxu0 %v795
  %v863 = vpop.f32.mrb[0].mxu0
  %v864 = vadd.f32 0.0, %v863
  %v865 = vpop.f32.mrb[0].mxu0
  %866 = vdwg.mxu0
  %v867 = vlaneseq
  %v868 = vshrl.u32 %v867, 7
  %v869 = vsub.s32 0, %v868
  %v870 = vrot.slane %v793, %v869
  %871 = vmatprep.subr.mxu0 0.0
  %872 = vmatpush1.msra.mxu0 %v864
  %873 = vmatprep.subr.mxu0 0.0
  %874 = vmatpush1.msra.mxu0 0.0
  %875 = vmatprep.subr.mxu0 0.0
  %876 = vmatpush1.msra.mxu0 0.0
  %877 = vmatprep.subr.mxu0 0.0
  %878 = vmatpush1.msra.mxu0 0.0
  %879 = vmatprep.subr.mxu0 0.0
  %880 = vmatpush1.msra.mxu0 0.0
  %881 = vmatprep.subr.mxu0 0.0
  %882 = vmatpush1.msra.mxu0 0.0
  %883 = vmatprep.subr.mxu0 0.0
  %884 = vmatpush1.msra.mxu0 0.0
  %885 = vmatprep.subr.mxu0 0.0
  %886 = vmatpush1.msra.mxu0 0.0
  %887 = vmatprep.subr.mxu0 0.0
  %888 = vmatpush1.msra.mxu0 0.0
  %889 = vmatprep.subr.mxu0 0.0
  %890 = vmatpush1.msra.mxu0 0.0
  %891 = vmatprep.subr.mxu0 0.0
  %892 = vmatpush1.msra.mxu0 0.0
  %893 = vmatprep.subr.mxu0 0.0
  %894 = vmatpush1.msra.mxu0 0.0
  %895 = vmatprep.subr.mxu0 0.0
  %896 = vmatpush1.msra.mxu0 0.0
  %897 = vmatprep.subr.mxu0 0.0
  %898 = vmatpush1.msra.mxu0 0.0
  %899 = vmatprep.subr.mxu0 0.0
  %900 = vmatpush1.msra.mxu0 0.0
  %901 = vmatprep.subr.mxu0 0.0
  %902 = vmatpush1.msra.mxu0 0.0
  %903 = vmatprep.subr.mxu0 0.0
  %904 = vmatpush1.msra.mxu0 0.0
  %905 = vmatprep.subr.mxu0 0.0
  %906 = vmatpush1.msra.mxu0 0.0
  %907 = vmatprep.subr.mxu0 0.0
  %908 = vmatpush1.msra.mxu0 0.0
  %909 = vmatprep.subr.mxu0 0.0
  %910 = vmatpush1.msra.mxu0 0.0
  %911 = vmatprep.subr.mxu0 0.0
  %912 = vmatpush1.msra.mxu0 0.0
  %913 = vmatprep.subr.mxu0 0.0
  %914 = vmatpush1.msra.mxu0 0.0
  %915 = vmatprep.subr.mxu0 0.0
  %916 = vmatpush1.msra.mxu0 0.0
  %917 = vmatprep.subr.mxu0 0.0
  %918 = vmatpush1.msra.mxu0 0.0
  %919 = vmatprep.subr.mxu0 0.0
  %920 = vmatpush1.msra.mxu0 0.0
  %921 = vmatprep.subr.mxu0 0.0
  %922 = vmatpush1.msra.mxu0 0.0
  %923 = vmatprep.subr.mxu0 0.0
  %924 = vmatpush1.msra.mxu0 0.0
  %925 = vmatprep.subr.mxu0 0.0
  %926 = vmatpush1.msra.mxu0 0.0
  %927 = vmatprep.subr.mxu0 0.0
  %928 = vmatpush1.msra.mxu0 0.0
  %929 = vmatprep.subr.mxu0 0.0
  %930 = vmatpush1.msra.mxu0 0.0
  %931 = vmatprep.subr.mxu0 0.0
  %932 = vmatpush1.msra.mxu0 0.0
  %933 = vmatprep.subr.mxu0 0.0
  %934 = vmatpush1.msra.mxu0 0.0
  %935 = vmatprep.mubr.f32.mxu0 0.0
  %936 = vmatmul.mubr.f32.gmra.mrb[0].mxu0 %v638
  %v937 = vpop.f32.mrb[0].mxu0
  %v938 = vadd.f32 %v870, %v937
  %v939 = vpop.f32.mrb[0].mxu0
  %940 = vdwg.mxu0
  %v941 = vmax.f32 %v938, 0.0
  %s942 = scalar_lea.vmem %s7, 192
  %v943 = vld [vmem:[%s942] sm:$0xff]
  %v944 = vld [vmem:[%s942 + $0x8] sm:$0xff]
  %v945 = vld [vmem:[%s942 + $0x10] sm:$0xff]
  %v946 = vld [vmem:[%s942 + $0x18] sm:$0xff]
  %v947 = vld [vmem:[%s6 + $0x6] sm:$0x1]
  %v948 = vlaneseq
  %v949 = vshrl.u32 %v948, 7
  %v950 = vsub.s32 0, %v949
  %v951 = vrot.slane %v947, %v950
  %v953 = vsel %vm216, %v941, 0
  %955 = vmatprep.subr.mxu0 0.0
  %956 = vmatpush1.msra.mxu0 %v943
  %957 = vmatprep.subr.mxu0 0.0
  %958 = vmatpush1.msra.mxu0 %v944
  %959 = vmatprep.subr.mxu0 0.0
  %960 = vmatpush1.msra.mxu0 %v945
  %961 = vmatprep.subr.mxu0 0.0
  %962 = vmatpush1.msra.mxu0 %v946
  %963 = vmatprep.subr.mxu0 0.0
  %964 = vmatpush1.msra.mxu0 0.0
  %965 = vmatprep.subr.mxu0 0.0
  %966 = vmatpush1.msra.mxu0 0.0
  %967 = vmatprep.subr.mxu0 0.0
  %968 = vmatpush1.msra.mxu0 0.0
  %969 = vmatprep.subr.mxu0 0.0
  %970 = vmatpush1.msra.mxu0 0.0
  %971 = vmatprep.subr.mxu0 0.0
  %972 = vmatpush1.msra.mxu0 0.0
  %973 = vmatprep.subr.mxu0 0.0
  %974 = vmatpush1.msra.mxu0 0.0
  %975 = vmatprep.subr.mxu0 0.0
  %976 = vmatpush1.msra.mxu0 0.0
  %977 = vmatprep.subr.mxu0 0.0
  %978 = vmatpush1.msra.mxu0 0.0
  %979 = vmatprep.subr.mxu0 0.0
  %980 = vmatpush1.msra.mxu0 0.0
  %981 = vmatprep.subr.mxu0 0.0
  %982 = vmatpush1.msra.mxu0 0.0
  %983 = vmatprep.subr.mxu0 0.0
  %984 = vmatpush1.msra.mxu0 0.0
  %985 = vmatprep.subr.mxu0 0.0
  %986 = vmatpush1.msra.mxu0 0.0
  %987 = vmatprep.subr.mxu0 0.0
  %988 = vmatpush1.msra.mxu0 0.0
  %989 = vmatprep.subr.mxu0 0.0
  %990 = vmatpush1.msra.mxu0 0.0
  %991 = vmatprep.subr.mxu0 0.0
  %992 = vmatpush1.msra.mxu0 0.0
  %993 = vmatprep.subr.mxu0 0.0
  %994 = vmatpush1.msra.mxu0 0.0
  %995 = vmatprep.subr.mxu0 0.0
  %996 = vmatpush1.msra.mxu0 0.0
  %997 = vmatprep.subr.mxu0 0.0
  %998 = vmatpush1.msra.mxu0 0.0
  %999 = vmatprep.subr.mxu0 0.0
  %1000 = vmatpush1.msra.mxu0 0.0
  %1001 = vmatprep.subr.mxu0 0.0
  %1002 = vmatpush1.msra.mxu0 0.0
  %1003 = vmatprep.subr.mxu0 0.0
  %1004 = vmatpush1.msra.mxu0 0.0
  %1005 = vmatprep.subr.mxu0 0.0
  %1006 = vmatpush1.msra.mxu0 0.0
  %1007 = vmatprep.subr.mxu0 0.0
  %1008 = vmatpush1.msra.mxu0 0.0
  %1009 = vmatprep.subr.mxu0 0.0
  %1010 = vmatpush1.msra.mxu0 0.0
  %1011 = vmatprep.subr.mxu0 0.0
  %1012 = vmatpush1.msra.mxu0 0.0
  %1013 = vmatprep.subr.mxu0 0.0
  %1014 = vmatpush1.msra.mxu0 0.0
  %1015 = vmatprep.subr.mxu0 0.0
  %1016 = vmatpush1.msra.mxu0 0.0
  %1017 = vmatprep.subr.mxu0 0.0
  %1018 = vmatpush1.msra.mxu0 0.0
  %1019 = vmatprep.mubr.f32.mxu0 0.0
  %1020 = vmatmul.mubr.f32.gmra.mrb[0].mxu0 %v953
  %v1021 = vpop.f32.mrb[0].mxu0
  %v1022 = vadd.f32 %v951, %v1021
  %v1023 = vpop.f32.mrb[0].mxu0
  %1024 = vdwg.mxu0
  %v1025 = vld [vmem:[%s6 + $0x7] sm:$0x1]
  %v1026 = vld [vmem:[%s6 + $0x8] sm:$0x1]
  %1028 = vrot.lane.b32.xlu0 %v1022, 4
  %v1029 = vpop.permute.xlu0 %1028
  %vm1031 = vcmask 31744
  %v1032 = vsel %vm1031, %v550, %v1029
  %v1033 = vsel %vm126, %v1032, 0.0
  %v1034 = vrot.slane %v1033, 4
  %v1035 = vadd.f32 %v1033, %v1034
  %v1036 = vrot.slane %v1035, 2
  %v1037 = vadd.f32 %v1035, %v1036
  %v1038 = vrot.slane %v1037, 1
  %v1039 = vadd.f32 %v1037, %v1038
  %v1040 = vrcp.pop 8.0
  %v1041 = vmul.f32 %v1039, %v1040
  %v1042 = vsub.f32 %v1032, %v1041
  %v1043 = vmul.f32 %v1042, %v1042
  %v1044 = vsel %vm126, %v1043, 0.0
  %v1045 = vrot.slane %v1044, 4
  %v1046 = vadd.f32 %v1044, %v1045
  %v1047 = vrot.slane %v1046, 2
  %v1048 = vadd.f32 %v1046, %v1047
  %v1049 = vrot.slane %v1048, 1
  %v1050 = vadd.f32 %v1048, %v1049
  %v1051 = vmul.f32 %v1050, %v1040
  %v1052 = vadd.f32 %v1051, 1e-05
  %v1053 = vrsqrt.pop %v1052
  %v1054 = vmul.f32 %v1042, %v1053
  %v1055 = vlaneseq
  %v1056 = vshrl.u32 %v1055, 7
  %v1057 = vsub.s32 0, %v1056
  %v1058 = vrot.slane %v1025, %v1057
  %v1059 = vmul.f32 %v1054, %v1058
  %v1060 = vlaneseq
  %v1061 = vshrl.u32 %v1060, 7
  %v1062 = vsub.s32 0, %v1061
  %v1063 = vrot.slane %v1026, %v1062
  %v1064 = vadd.f32 %v1059, %v1063
  %1065 = vset.pattern.permute.xlu0 32
  %1066 = vperm.xlu0 %1065, %v467
  %v1067 = vpop.permute.xlu0 %1066
  %v1069 = vmul.f32 %v1067, %v1064
  %1070 = vset.pattern.permute.xlu0 33
  %1071 = vperm.xlu0 %1070, %v467
  %v1072 = vpop.permute.xlu0 %1071
  %v1074 = vmul.f32 %v1072, %v1064
  %1076 = vrot.lane.b32.xlu0 %v1074, 124
  %v1077 = vpop.permute.xlu0 %1076
  %v1079 = vadd.f32 %v1069, %v1077
  %1080 = vst.msk [vmem:[%s8] sm:$0xff] %vm1031, %v1079
  // Predicated region
  $region34: #{attr_atk_community_forward.1} parent=0 // pred_check
    _
  $region35: #{attr_atk_community_forward.1} parent=0 // pred_check_branch
    %1082 = sbr.rel (0) target = $region37
  $region36: #{attr_atk_community_forward.1} parent=0 // pred_region
    _
  $region37: #{attr_atk_community_forward.1} parent=0 // pred_fallthru
    _
  // Predicated region
  $region38: #{attr_atk_community_forward.1} parent=0 // pred_check
    _
  $region39: #{attr_atk_community_forward.1} parent=0 // pred_check_branch
    %1084 = sbr.rel (0) target = $region41
  $region40: #{attr_atk_community_forward.1} parent=0 // pred_region
    _
  $region41: #{attr_atk_community_forward.1} parent=0 // pred_fallthru
    _

</llo_original>
